<compile_context>
chip_gen: v7x
topology: tpu7x:2x2x1
jax: 0.10.0
libtpu: 0.0.40
codegen_flags: <defaults>
</compile_context>

<pallas_src>
import jax
import jax.numpy as jnp
from jax.experimental import pallas as pl
from jax.experimental.pallas import tpu as pltpu

_SUBLANES = 8
_LANES = 128
# Per-block byte budget: 2 MiB block -> ~8 MiB peak with double-buffered
# input + output, safe on v5e/v6e/v7x default scoped-VMEM limits.
_TARGET_BLOCK_BYTES = 2 * 1024 * 1024


def _copy_kernel(x_ref, o_ref):
    # Lane-dense identity copy of the already-squeezed tile.
    o_ref[...] = x_ref[...]


def squeeze_channels(x: jax.Array) -> jax.Array:
    """Pallas equivalent of torch.squeeze(x, 2) for a 3-D input."""
    assert x.ndim == 3, "expected a 3-D tensor"
    if x.shape[2] != 1:
        # torch.squeeze(x, 2) is a no-op when dim 2 is not size 1.
        return x

    B, C, _ = x.shape
    n = B * C
    elt = jnp.dtype(x.dtype).itemsize

    # Pick the widest lane-dense last dim (multiple of 128) that divides n;
    # otherwise fall back to the natural squeezed (B, C) layout (C on lanes).
    rows, cols = B, C
    for c in (2048, 1024, 512, 256, 128):
        if n % c == 0:
            rows, cols = n // c, c
            break

    # Free metadata reshape — this *is* the squeeze (plus layout flattening).
    x2d = jnp.reshape(x, (rows, cols))

    # Row-tile sized to the VMEM budget; sublane-aligned unless it covers the
    # whole array (full-extent blocks are exempt from the (8, 128) rule).
    tr = max(1, _TARGET_BLOCK_BYTES // max(cols * elt, 1))
    if tr >= rows:
        tr = rows
    else:
        tr = max(_SUBLANES, (tr // _SUBLANES) * _SUBLANES)

    grid = (pl.cdiv(rows, tr),)

    out2d = pl.pallas_call(
        _copy_kernel,
        out_shape=jax.ShapeDtypeStruct((rows, cols), x.dtype),
        grid=grid,
        in_specs=[pl.BlockSpec((tr, cols), lambda i: (i, 0))],
        out_specs=pl.BlockSpec((tr, cols), lambda i: (i, 0)),
        compiler_params=pltpu.CompilerParams(
            dimension_semantics=("parallel",)),
    )(x2d)

    # Free metadata reshape back to the squeezed shape.
    return jnp.reshape(out2d, (B, C))


if __name__ == "__main__":
    key = jax.random.PRNGKey(0)

    # Small shape consistent with the module's forward: (batch, channels, 1).
    B, C = 2, 4
    x = jax.random.normal(key, (B, C, 1), dtype=jnp.float32)

    y = squeeze_channels(x)
    jax.block_until_ready(y)

    ref = jnp.squeeze(x, axis=2)
    assert y.shape == (B, C), y.shape
    assert y.dtype == x.dtype
    assert jnp.array_equal(y, ref)

    # Also exercise the lane-dense (128-multiple) path with a slightly wider,
    # still-small input.
    x2 = jax.random.normal(jax.random.PRNGKey(1), (4, 256, 1), dtype=jnp.float32)
    y2 = squeeze_channels(x2)
    jax.block_until_ready(y2)
    assert jnp.array_equal(y2, jnp.squeeze(x2, axis=2))

    print("KERNEL_OK")
</pallas_src>

<mosaic_0001>
module attributes {stable_mosaic.version = 11 : i64} {
  func.func @_copy_kernel(%arg0: i32, %arg1: memref<2x4xf32, #tpu.memory_space<vmem>>, %arg2: memref<2x4xf32, #tpu.memory_space<vmem>>) attributes {dimension_semantics = [#tpu.dimension_semantics<parallel>], iteration_bounds = array<i64: 1>, scalar_prefetch = 0 : i64, scratch_operands = 0 : i64, tpu.core_type = #tpu.core_type<tc>, window_params = [{transform_indices = @transform_0, window_bounds = array<i64: 2, 4>}, {transform_indices = @transform_1, window_bounds = array<i64: 2, 4>}]} {
    %c0 = arith.constant 0 : index
    %c0_0 = arith.constant 0 : index
    %0 = vector.load %arg1[%c0, %c0_0] : memref<2x4xf32, #tpu.memory_space<vmem>>, vector<2x4xf32>
    %c0_1 = arith.constant 0 : index
    %c0_2 = arith.constant 0 : index
    %1 = vector.load %arg2[%c0_1, %c0_2] : memref<2x4xf32, #tpu.memory_space<vmem>>, vector<2x4xf32>
    tpu.vector_store %arg2[%c0_1, %c0_2], %0 {strides = array<i32>} : memref<2x4xf32, #tpu.memory_space<vmem>>, vector<2x4xf32>,
    return
  }
  func.func @transform_0(%arg0: i32) -> (i32, i32) {
    %c0_i32 = arith.constant 0 : i32
    %c0_i32_0 = arith.constant 0 : i32
    return %arg0, %c0_i32 : i32, i32
  }
  func.func @transform_1(%arg0: i32) -> (i32, i32) {
    %c0_i32 = arith.constant 0 : i32
    %c0_i32_0 = arith.constant 0 : i32
    return %arg0, %c0_i32 : i32, i32
  }
}

</mosaic_0001>

<llo_original>
// kernel: tpu_custom_call.1
$region0: #{tpu_custom_call.1}
  #allocation0 [shape = 'u32[]', space=smem, size = 0x4, offset = 0x4, fixed_abs, tag = 'smem constant byte address 0x4 - core index']
  #allocation1 [shape = 'u32[144,128]{1,0:T(1,128)}', space=vmem, size = 0x12000, scoped, tag = 'internal scratch']
  %s0 = inlined_call_operand.hbm [shape: f32[2,4], index: 0, kind: input, shape index: {}]
  %s1 = inlined_call_operand.hbm [shape: f32[2,4], index: 1, kind: output, shape index: {}]
  %s2 = sld [smem:[#allocation0]]
  $region18: #{tpu_custom_call.1} parent=0
    _
  %s4 = ssub.s32 1, %s2
  %s5 = scalar_select 0, %s4, %s2
  $region1: #{tpu_custom_call.1} parent=0
    #allocation2 [shape = 'u8[1024]{0}', space=vmem, size = 0x400, scoped, tag = 'input window, operand 0, single buffered']
    #allocation3 [shape = 's32[1]{0}', space=sflag, size = 0x4, scoped, tag = 'scoped memory for tpu_custom_call.1']
    #allocation4 [shape = 's32[1]{0}', space=sflag, size = 0x4, scoped, tag = 'scoped memory for tpu_custom_call.1']
    #allocation5 [shape = 'u8[1024]{0}', space=vmem, size = 0x400, scoped, tag = 'output window, operand 0, single buffered']
    %6 = vsyncpa [#allocation3], 0
    %7 = vsyncpa [#allocation4], 0
    // Predicated region
    $region2: #{tpu_custom_call.1} parent=1 // pred_check
      _
    $region3: #{tpu_custom_call.1} parent=1 // pred_check_branch
      %9 = sbr.rel (0) target = $region5
    $region4: #{tpu_custom_call.1} parent=1 // pred_region
      %s11 = ssub.s32 32, 32
      %12 = vsyncadd [#allocation3], %s11
      %s14 = sshll.u32 [#allocation2], 4
      %s15 = int_to_ptr.vmem [resolvable:$true] %s14
      %17 = dma.hbm_to_vmem [thread:$0]  %s0, 32, %s15, [#allocation3]
    $region5: #{tpu_custom_call.1} parent=1 // pred_fallthru
      _
    // Predicated region
    $region6: #{tpu_custom_call.1} parent=1 // pred_check
      _
    $region7: #{tpu_custom_call.1} parent=1 // pred_check_branch
      %19 = sbr.rel (0) target = $region9
    $region8: #{tpu_custom_call.1} parent=1 // pred_region
      %20 = dma.done [#allocation3], 32
    $region9: #{tpu_custom_call.1} parent=1 // pred_fallthru
      _
    %v21 = vld [vmem:[#allocation2] sm:$0x3]
    %vm22 = vcmask 25600
    %23 = vst.msk [vmem:[#allocation5] sm:$0x3] %vm22, %v21
    // Predicated region
    $region10: #{tpu_custom_call.1} parent=1 // pred_check
      _
    $region11: #{tpu_custom_call.1} parent=1 // pred_check_branch
      %25 = sbr.rel (0) target = $region13
    $region12: #{tpu_custom_call.1} parent=1 // pred_region
      %s27 = ssub.s32 32, 32
      %28 = vsyncadd [#allocation4], %s27
      %s30 = sshll.u32 [#allocation5], 4
      %s31 = int_to_ptr.vmem [resolvable:$true] %s30
      %33 = dma.vmem_to_hbm [thread:$0]  %s31, 32, %s1, [#allocation4]
    $region13: #{tpu_custom_call.1} parent=1 // pred_fallthru
      _
    // Predicated region
    $region14: #{tpu_custom_call.1} parent=1 // pred_check
      _
    $region15: #{tpu_custom_call.1} parent=1 // pred_check_branch
      %35 = sbr.rel (0) target = $region17
    $region16: #{tpu_custom_call.1} parent=1 // pred_region
      %36 = dma.done [#allocation4], 32
    $region17: #{tpu_custom_call.1} parent=1 // pred_fallthru
      _
    %37 = vsyncpa [#allocation3], 1
    %38 = vsyncpa [#allocation4], 1

</llo_original>
